<compile_context>
chip_gen: v6e
topology: v6e:2x2x1
jax: 0.10.0
libtpu: 0.0.40
codegen_flags: <defaults>
</compile_context>

<pallas_src>
import jax
import jax.numpy as jnp
from jax.experimental import pallas as pl
from jax.experimental.pallas import tpu as pltpu

INPUT_SIZE = 5
HIDDEN1 = 40
HIDDEN2 = 80
NUM_CLASSES = 2

LANE = 128      # TPU lane quantum: pad hidden / output widths to this
MAX_TM = 512    # batch tile (sweepable 256-1024; kept modest for v7x 64 MiB VMEM)


def _round_up(n, m):
    return ((n + m - 1) // m) * m


def mlp_kernel(x_ref, w1_ref, b1_ref, w2_ref, b2_ref, w3_ref, b3_ref, o_ref):
    # One (TM, ·) batch tile of the 3-layer MLP. All widths are lane-dense
    # (128), so every matmul is a clean full-lane MXU op and the final store
    # is an unmasked full-width vst. Three MXU matmuls + VPU bias/ReLU.
    x = x_ref[...]                                                   # (TM, 5) bf16

    h1 = jnp.dot(x, w1_ref[...], preferred_element_type=jnp.float32)
    h1 = jnp.maximum(h1 + b1_ref[...], 0.0)                          # (TM, 128) f32

    h2 = jnp.dot(h1.astype(jnp.bfloat16), w2_ref[...],
                 preferred_element_type=jnp.float32)
    h2 = jnp.maximum(h2 + b2_ref[...], 0.0)                          # (TM, 128) f32

    out = jnp.dot(h2.astype(jnp.bfloat16), w3_ref[...],
                  preferred_element_type=jnp.float32)
    out = out + b3_ref[...]                                          # (TM, 128) f32

    o_ref[...] = out.astype(o_ref.dtype)


def _pad2(a, rows, cols, dtype):
    """Zero-pad a 2-D array to (rows, cols) and cast. Zero padding is exact
    for this MLP (padded hidden units are ReLU(0)=0; padded output cols are
    sliced off in the wrapper)."""
    out = jnp.zeros((rows, cols), dtype)
    return out.at[: a.shape[0], : a.shape[1]].set(a.astype(dtype))


def net_forward(x, params):
    w1, b1, w2, b2, w3, b3 = params   # (in, out) layout, f32

    # Lane-dense, bf16 weights; f32 biases.
    w1p = _pad2(w1, INPUT_SIZE, LANE, jnp.bfloat16)
    b1p = _pad2(b1, 1, LANE, jnp.float32)
    w2p = _pad2(w2, LANE, LANE, jnp.bfloat16)
    b2p = _pad2(b2, 1, LANE, jnp.float32)
    w3p = _pad2(w3, LANE, LANE, jnp.bfloat16)
    b3p = _pad2(b3, 1, LANE, jnp.float32)

    B = x.shape[0]
    tm = min(MAX_TM, _round_up(B, 8))          # sublane-aligned batch tile
    n_blocks = pl.cdiv(B, tm)
    b_pad = n_blocks * tm

    xb = x.astype(jnp.bfloat16)
    if b_pad != B:
        xb = jnp.pad(xb, ((0, b_pad - B), (0, 0)))   # zero rows; discarded below

    cost = pl.CostEstimate(
        flops=2 * B * (INPUT_SIZE * HIDDEN1 + HIDDEN1 * HIDDEN2
                       + HIDDEN2 * NUM_CLASSES),
        bytes_accessed=(xb.size * 2 + b_pad * LANE * 4
                        + (w1p.size + w2p.size + w3p.size) * 2
                        + (b1p.size + b2p.size + b3p.size) * 4),
        transcendentals=0,
    )

    # Weights / biases: same full block every grid step (stay VMEM-resident).
    rep = lambda shape: pl.BlockSpec(shape, lambda i: (0, 0))

    out_padded = pl.pallas_call(
        mlp_kernel,
        out_shape=jax.ShapeDtypeStruct((b_pad, LANE), jnp.float32),
        grid=(n_blocks,),
        in_specs=[
            pl.BlockSpec((tm, INPUT_SIZE), lambda i: (i, 0)),  # x: batch-tiled
            rep((INPUT_SIZE, LANE)), rep((1, LANE)),           # w1, b1
            rep((LANE, LANE)),       rep((1, LANE)),           # w2, b2
            rep((LANE, LANE)),       rep((1, LANE)),           # w3, b3
        ],
        out_specs=pl.BlockSpec((tm, LANE), lambda i: (i, 0)),
        compiler_params=pltpu.CompilerParams(
            dimension_semantics=("parallel",),   # 2x on v7x dual TC; no-op v5e/v6e
            vmem_limit_bytes=32 << 20,           # safe on v7x (64 MiB physical)
        ),
        cost_estimate=cost,
    )(xb, w1p, b1p, w2p, b2p, w3p, b3p)

    return out_padded[:B, :NUM_CLASSES]


def init_params(key):
    # Deterministic init mimicking PyTorch Linear default (uniform in
    # [-1/sqrt(fan_in), 1/sqrt(fan_in)]), shapes stored as (in, out).
    def linear_init(k, fan_in, fan_out):
        kw, kb = jax.random.split(k)
        bound = 1.0 / jnp.sqrt(fan_in)
        w = jax.random.uniform(kw, (fan_in, fan_out), jnp.float32, -bound, bound)
        b = jax.random.uniform(kb, (1, fan_out), jnp.float32, -bound, bound)
        return w, b

    k1, k2, k3 = jax.random.split(key, 3)
    w1, b1 = linear_init(k1, INPUT_SIZE, HIDDEN1)
    w2, b2 = linear_init(k2, HIDDEN1, HIDDEN2)
    w3, b3 = linear_init(k3, HIDDEN2, NUM_CLASSES)
    return (w1, b1, w2, b2, w3, b3)


def reference_forward(x, params):
    # Matches the kernel's numerics: bf16 MXU inputs, f32 accumulation.
    w1, b1, w2, b2, w3, b3 = params
    bf = jnp.bfloat16
    h1 = jnp.maximum(
        jnp.dot(x.astype(bf), w1.astype(bf),
                preferred_element_type=jnp.float32) + b1, 0.0)
    h2 = jnp.maximum(
        jnp.dot(h1.astype(bf), w2.astype(bf),
                preferred_element_type=jnp.float32) + b2, 0.0)
    return jnp.dot(h2.astype(bf), w3.astype(bf),
                   preferred_element_type=jnp.float32) + b3


if __name__ == "__main__":
    key = jax.random.PRNGKey(0)
    kx, kp = jax.random.split(key)

    B = 8
    x = jax.random.normal(kx, (B, INPUT_SIZE), jnp.float32)
    params = init_params(kp)

    out = net_forward(x, params)
    jax.block_until_ready(out)

    ref = reference_forward(x, params)
    assert out.shape == (B, NUM_CLASSES)
    assert jnp.allclose(out, ref, atol=1e-2, rtol=1e-2), "mismatch vs reference"

    print("KERNEL_OK")
</pallas_src>

<mosaic_0001>
module attributes {stable_mosaic.version = 11 : i64} {
  func.func @mlp_kernel(%arg0: i32, %arg1: memref<8x5xbf16, #tpu.memory_space<vmem>>, %arg2: memref<5x128xbf16, #tpu.memory_space<vmem>>, %arg3: memref<1x128xf32, #tpu.memory_space<vmem>>, %arg4: memref<128x128xbf16, #tpu.memory_space<vmem>>, %arg5: memref<1x128xf32, #tpu.memory_space<vmem>>, %arg6: memref<128x128xbf16, #tpu.memory_space<vmem>>, %arg7: memref<1x128xf32, #tpu.memory_space<vmem>>, %arg8: memref<8x128xf32, #tpu.memory_space<vmem>>) attributes {dimension_semantics = [#tpu.dimension_semantics<parallel>], iteration_bounds = array<i64: 1>, scalar_prefetch = 0 : i64, scratch_operands = 0 : i64, tpu.core_type = #tpu.core_type<tc>, window_params = [{transform_indices = @transform_0, window_bounds = array<i64: 8, 5>}, {pipeline_mode = #tpu.pipeline_mode<synchronous>, transform_indices = @transform_1, window_bounds = array<i64: 5, 128>}, {pipeline_mode = #tpu.pipeline_mode<synchronous>, transform_indices = @transform_2, window_bounds = array<i64: 1, 128>}, {pipeline_mode = #tpu.pipeline_mode<synchronous>, transform_indices = @transform_3, window_bounds = array<i64: 128, 128>}, {pipeline_mode = #tpu.pipeline_mode<synchronous>, transform_indices = @transform_4, window_bounds = array<i64: 1, 128>}, {pipeline_mode = #tpu.pipeline_mode<synchronous>, transform_indices = @transform_5, window_bounds = array<i64: 128, 128>}, {pipeline_mode = #tpu.pipeline_mode<synchronous>, transform_indices = @transform_6, window_bounds = array<i64: 1, 128>}, {transform_indices = @transform_7, window_bounds = array<i64: 8, 128>}]} {
    %c0 = arith.constant 0 : index
    %c0_0 = arith.constant 0 : index
    %0 = vector.load %arg1[%c0, %c0_0] : memref<8x5xbf16, #tpu.memory_space<vmem>>, vector<8x5xbf16>
    %c0_1 = arith.constant 0 : index
    %c0_2 = arith.constant 0 : index
    %1 = vector.load %arg2[%c0_1, %c0_2] : memref<5x128xbf16, #tpu.memory_space<vmem>>, vector<5x128xbf16>
    %cst = arith.constant dense<0.000000e+00> : vector<8x128xf32>
    %2 = tpu.matmul %0, %1, %cst {dimension_numbers = #tpu.dot_dimension_numbers<[1], [0], [0], [1], [0, 0, 1, 1], [], []>} : vector<8x5xbf16>, vector<5x128xbf16>, vector<8x128xf32> -> vector<8x128xf32>
    %c0_3 = arith.constant 0 : index
    %c0_4 = arith.constant 0 : index
    %3 = vector.load %arg3[%c0_3, %c0_4] : memref<1x128xf32, #tpu.memory_space<vmem>>, vector<1x128xf32>
    %4 = vector.broadcast %3 : vector<1x128xf32> to vector<8x128xf32>
    %5 = arith.addf %2, %4 : vector<8x128xf32>
    %cst_5 = arith.constant 0.000000e+00 : f32
    %6 = vector.broadcast %cst_5 : f32 to vector<8x128xf32>
    %7 = arith.maximumf %5, %6 : vector<8x128xf32>
    %8 = arith.truncf %7 : vector<8x128xf32> to vector<8x128xbf16>
    %c0_6 = arith.constant 0 : index
    %c0_7 = arith.constant 0 : index
    %9 = vector.load %arg4[%c0_6, %c0_7] : memref<128x128xbf16, #tpu.memory_space<vmem>>, vector<128x128xbf16>
    %cst_8 = arith.constant dense<0.000000e+00> : vector<8x128xf32>
    %10 = tpu.matmul %8, %9, %cst_8 {dimension_numbers = #tpu.dot_dimension_numbers<[1], [0], [0], [1], [0, 0, 1, 1], [], []>} : vector<8x128xbf16>, vector<128x128xbf16>, vector<8x128xf32> -> vector<8x128xf32>
    %c0_9 = arith.constant 0 : index
    %c0_10 = arith.constant 0 : index
    %11 = vector.load %arg5[%c0_9, %c0_10] : memref<1x128xf32, #tpu.memory_space<vmem>>, vector<1x128xf32>
    %12 = vector.broadcast %11 : vector<1x128xf32> to vector<8x128xf32>
    %13 = arith.addf %10, %12 : vector<8x128xf32>
    %cst_11 = arith.constant 0.000000e+00 : f32
    %14 = vector.broadcast %cst_11 : f32 to vector<8x128xf32>
    %15 = arith.maximumf %13, %14 : vector<8x128xf32>
    %16 = arith.truncf %15 : vector<8x128xf32> to vector<8x128xbf16>
    %c0_12 = arith.constant 0 : index
    %c0_13 = arith.constant 0 : index
    %17 = vector.load %arg6[%c0_12, %c0_13] : memref<128x128xbf16, #tpu.memory_space<vmem>>, vector<128x128xbf16>
    %cst_14 = arith.constant dense<0.000000e+00> : vector<8x128xf32>
    %18 = tpu.matmul %16, %17, %cst_14 {dimension_numbers = #tpu.dot_dimension_numbers<[1], [0], [0], [1], [0, 0, 1, 1], [], []>} : vector<8x128xbf16>, vector<128x128xbf16>, vector<8x128xf32> -> vector<8x128xf32>
    %c0_15 = arith.constant 0 : index
    %c0_16 = arith.constant 0 : index
    %19 = vector.load %arg7[%c0_15, %c0_16] : memref<1x128xf32, #tpu.memory_space<vmem>>, vector<1x128xf32>
    %20 = vector.broadcast %19 : vector<1x128xf32> to vector<8x128xf32>
    %21 = arith.addf %18, %20 : vector<8x128xf32>
    %c0_17 = arith.constant 0 : index
    %c0_18 = arith.constant 0 : index
    %22 = vector.load %arg8[%c0_17, %c0_18] : memref<8x128xf32, #tpu.memory_space<vmem>>, vector<8x128xf32>
    tpu.vector_store %arg8[%c0_17, %c0_18], %21 {strides = array<i32>} : memref<8x128xf32, #tpu.memory_space<vmem>>, vector<8x128xf32>,
    return
  }
  func.func @transform_0(%arg0: i32) -> (i32, i32) {
    %c0_i32 = arith.constant 0 : i32
    %c0_i32_0 = arith.constant 0 : i32
    return %arg0, %c0_i32 : i32, i32
  }
  func.func @transform_1(%arg0: i32) -> (i32, i32) {
    %c0_i32 = arith.constant 0 : i32
    %c0_i32_0 = arith.constant 0 : i32
    %c0_i32_1 = arith.constant 0 : i32
    return %c0_i32, %c0_i32_0 : i32, i32
  }
  func.func @transform_2(%arg0: i32) -> (i32, i32) {
    %c0_i32 = arith.constant 0 : i32
    %c0_i32_0 = arith.constant 0 : i32
    %c0_i32_1 = arith.constant 0 : i32
    return %c0_i32, %c0_i32_0 : i32, i32
  }
  func.func @transform_3(%arg0: i32) -> (i32, i32) {
    %c0_i32 = arith.constant 0 : i32
    %c0_i32_0 = arith.constant 0 : i32
    %c0_i32_1 = arith.constant 0 : i32
    return %c0_i32, %c0_i32_0 : i32, i32
  }
  func.func @transform_4(%arg0: i32) -> (i32, i32) {
    %c0_i32 = arith.constant 0 : i32
    %c0_i32_0 = arith.constant 0 : i32
    %c0_i32_1 = arith.constant 0 : i32
    return %c0_i32, %c0_i32_0 : i32, i32
  }
  func.func @transform_5(%arg0: i32) -> (i32, i32) {
    %c0_i32 = arith.constant 0 : i32
    %c0_i32_0 = arith.constant 0 : i32
    %c0_i32_1 = arith.constant 0 : i32
    return %c0_i32, %c0_i32_0 : i32, i32
  }
  func.func @transform_6(%arg0: i32) -> (i32, i32) {
    %c0_i32 = arith.constant 0 : i32
    %c0_i32_0 = arith.constant 0 : i32
    %c0_i32_1 = arith.constant 0 : i32
    return %c0_i32, %c0_i32_0 : i32, i32
  }
  func.func @transform_7(%arg0: i32) -> (i32, i32) {
    %c0_i32 = arith.constant 0 : i32
    %c0_i32_0 = arith.constant 0 : i32
    return %arg0, %c0_i32 : i32, i32
  }
}

</mosaic_0001>

<llo_original>
// kernel: tpu_custom_call.1
$region0: #{tpu_custom_call.1}
  #allocation0 [shape = 'u32[]', space=smem, size = 0x4, offset = 0x4, fixed_abs, tag = 'smem constant byte address 0x4 - core index']
  #allocation1 [shape = 'u32[144,128]{1,0:T(1,128)}', space=vmem, size = 0x12000, scoped, tag = 'internal scratch']
  %s0 = inlined_call_operand.hbm [shape: bf16[8,5], index: 0, kind: input, shape index: {}]
  %s1 = inlined_call_operand.hbm [shape: bf16[5,128], index: 1, kind: input, shape index: {}]
  %s2 = inlined_call_operand.vmem [shape: f32[1,128], index: 2, kind: input, shape index: {}]
  %s3 = inlined_call_operand.hbm [shape: bf16[128,128], index: 3, kind: input, shape index: {}]
  %s4 = inlined_call_operand.vmem [shape: f32[1,128], index: 4, kind: input, shape index: {}]
  %s5 = inlined_call_operand.hbm [shape: bf16[128,128], index: 5, kind: input, shape index: {}]
  %s6 = inlined_call_operand.vmem [shape: f32[1,128], index: 6, kind: input, shape index: {}]
  %s7 = inlined_call_operand.hbm [shape: f32[8,128], index: 7, kind: output, shape index: {}]
  %s8 = sld [smem:[#allocation0]]
  $region54: #{tpu_custom_call.1} parent=0
    _
  %s10 = ssub.s32 1, %s8
  %s11 = scalar_select 0, %s10, %s8
  $region1: #{tpu_custom_call.1} parent=0
    #allocation2 [shape = 'u8[2048]{0}', space=vmem, size = 0x800, scoped, tag = 'input window, operand 0, single buffered']
    #allocation3 [shape = 's32[1]{0}', space=sflag, size = 0x4, scoped, tag = 'scoped memory for tpu_custom_call.1']
    #allocation4 [shape = 's32[1]{0}', space=sflag, size = 0x4, scoped, tag = 'scoped memory for tpu_custom_call.1']
    #allocation5 [shape = 'u8[2048]{0}', space=vmem, size = 0x800, scoped, tag = 'input window, operand 1, single buffered']
    #allocation6 [shape = 's32[1]{0}', space=sflag, size = 0x4, scoped, tag = 'scoped memory for tpu_custom_call.1']
    #allocation7 [shape = 'u8[32768]{0}', space=vmem, size = 0x8000, scoped, tag = 'input window, operand 3, single buffered']
    #allocation8 [shape = 'u8[32768]{0}', space=vmem, size = 0x8000, scoped, tag = 'input window, operand 5, single buffered']
    #allocation9 [shape = 's32[1]{0}', space=sflag, size = 0x4, scoped, tag = 'scoped memory for tpu_custom_call.1']
    #allocation10 [shape = 'u8[4096]{0}', space=vmem, size = 0x1000, scoped, tag = 'output window, operand 0, single buffered']
    %12 = vsyncpa [#allocation3], 0
    %13 = vsyncpa [#allocation6], 0
    %14 = vsyncpa [#allocation9], 0
    %15 = vsyncpa [#allocation4], 0
    // Predicated region
    $region2: #{tpu_custom_call.1} parent=1 // pred_check
      _
    $region3: #{tpu_custom_call.1} parent=1 // pred_check_branch
      %17 = sbr.rel (0) target = $region5
    $region4: #{tpu_custom_call.1} parent=1 // pred_region
      %s19 = ssub.s32 64, 64
      %20 = vsyncadd [#allocation3], %s19
      %s22 = sshll.u32 [#allocation2], 4
      %s23 = int_to_ptr.vmem [resolvable:$true] %s22
      %25 = dma.hbm_to_vmem [thread:$0]  %s0, 64, %s23, [#allocation3]
    $region5: #{tpu_custom_call.1} parent=1 // pred_fallthru
      _
    // Predicated region
    $region6: #{tpu_custom_call.1} parent=1 // pred_check
      _
    $region7: #{tpu_custom_call.1} parent=1 // pred_check_branch
      %27 = sbr.rel (0) target = $region9
    $region8: #{tpu_custom_call.1} parent=1 // pred_region
      %s29 = ssub.s32 64, 64
      %30 = vsyncadd [#allocation6], %s29
      %s32 = sshll.u32 [#allocation5], 4
      %s33 = int_to_ptr.vmem [resolvable:$true] %s32
      %35 = dma.hbm_to_vmem [thread:$0]  %s1, 64, %s33, [#allocation6]
    $region9: #{tpu_custom_call.1} parent=1 // pred_fallthru
      _
    // Predicated region
    $region10: #{tpu_custom_call.1} parent=1 // pred_check
      _
    $region11: #{tpu_custom_call.1} parent=1 // pred_check_branch
      %37 = sbr.rel (0) target = $region13
    $region12: #{tpu_custom_call.1} parent=1 // pred_region
      _
    $region13: #{tpu_custom_call.1} parent=1 // pred_fallthru
      _
    // Predicated region
    $region14: #{tpu_custom_call.1} parent=1 // pred_check
      _
    $region15: #{tpu_custom_call.1} parent=1 // pred_check_branch
      %39 = sbr.rel (0) target = $region17
    $region16: #{tpu_custom_call.1} parent=1 // pred_region
      %s41 = ssub.s32 1024, 1024
      %42 = vsyncadd [#allocation6], %s41
      %s43 = sshll.u32 [#allocation7], 4
      %s44 = int_to_ptr.vmem [resolvable:$true] %s43
      %49 = dma.hbm_to_vmem [thread:$0]  %s3, 1024, %s44, [#allocation6], 64, 64, 4
    $region17: #{tpu_custom_call.1} parent=1 // pred_fallthru
      _
    // Predicated region
    $region18: #{tpu_custom_call.1} parent=1 // pred_check
      _
    $region19: #{tpu_custom_call.1} parent=1 // pred_check_branch
      %51 = sbr.rel (0) target = $region21
    $region20: #{tpu_custom_call.1} parent=1 // pred_region
      _
    $region21: #{tpu_custom_call.1} parent=1 // pred_fallthru
      _
    // Predicated region
    $region22: #{tpu_custom_call.1} parent=1 // pred_check
      _
    $region23: #{tpu_custom_call.1} parent=1 // pred_check_branch
      %53 = sbr.rel (0) target = $region25
    $region24: #{tpu_custom_call.1} parent=1 // pred_region
      %s55 = ssub.s32 1024, 1024
      %56 = vsyncadd [#allocation9], %s55
      %s57 = sshll.u32 [#allocation8], 4
      %s58 = int_to_ptr.vmem [resolvable:$true] %s57
      %63 = dma.hbm_to_vmem [thread:$0]  %s5, 1024, %s58, [#allocation9], 64, 64, 4
    $region25: #{tpu_custom_call.1} parent=1 // pred_fallthru
      _
    // Predicated region
    $region26: #{tpu_custom_call.1} parent=1 // pred_check
      _
    $region27: #{tpu_custom_call.1} parent=1 // pred_check_branch
      %65 = sbr.rel (0) target = $region29
    $region28: #{tpu_custom_call.1} parent=1 // pred_region
      _
    $region29: #{tpu_custom_call.1} parent=1 // pred_fallthru
      _
    // Predicated region
    $region30: #{tpu_custom_call.1} parent=1 // pred_check
      _
    $region31: #{tpu_custom_call.1} parent=1 // pred_check_branch
      %67 = sbr.rel (0) target = $region33
    $region32: #{tpu_custom_call.1} parent=1 // pred_region
      %68 = dma.done [#allocation3], 64
    $region33: #{tpu_custom_call.1} parent=1 // pred_fallthru
      _
    // Predicated region
    $region34: #{tpu_custom_call.1} parent=1 // pred_check
      _
    $region35: #{tpu_custom_call.1} parent=1 // pred_check_branch
      %70 = sbr.rel (0) target = $region37
    $region36: #{tpu_custom_call.1} parent=1 // pred_region
      %71 = dma.done [#allocation6], 64
    $region37: #{tpu_custom_call.1} parent=1 // pred_fallthru
      _
    // Predicated region
    $region38: #{tpu_custom_call.1} parent=1 // pred_check
      _
    $region39: #{tpu_custom_call.1} parent=1 // pred_check_branch
      %73 = sbr.rel (0) target = $region41
    $region40: #{tpu_custom_call.1} parent=1 // pred_region
      %74 = dma.done [#allocation6], 1024
    $region41: #{tpu_custom_call.1} parent=1 // pred_fallthru
      _
    // Predicated region
    $region42: #{tpu_custom_call.1} parent=1 // pred_check
      _
    $region43: #{tpu_custom_call.1} parent=1 // pred_check_branch
      %76 = sbr.rel (0) target = $region45
    $region44: #{tpu_custom_call.1} parent=1 // pred_region
      %77 = dma.done [#allocation9], 1024
    $region45: #{tpu_custom_call.1} parent=1 // pred_fallthru
      _
    %v79 = vld [vmem:[#allocation2] sm:$0xf]
    %v80 = vld [vmem:[#allocation5] sm:$0x7]
    %v81 = vld [vmem:[%s2] sm:$0x1]
    %v83 = vlaneseq
    %v84 = vshrl.u32 %v83, 7
    %v85 = vsub.s32 0, %v84
    %v86 = vrot.slane %v81, %v85
    %vm88 = vcmask 39936
    %v90 = vsel %vm88, %v79, 0
    %vm92 = vcmask 1041408
    %vm93 = vcmask 1042432
    %v94 = vsel %vm92, 4294967295, 65535
    %v95 = vsel %vm93, %v94, 0
    %v97 = vand.u32 %v80, %v95
    %99 = vmatprep.subr.bf16.mxu0 0
    %100 = vmatpush1.bf16.msra.mxu0 0
    %101 = vmatprep.subr.bf16.mxu0 0
    %102 = vmatpush1.bf16.msra.mxu0 0
    %103 = vmatprep.subr.bf16.mxu0 0
    %104 = vmatpush1.bf16.msra.mxu0 0
    %105 = vmatprep.subr.bf16.mxu0 0
    %106 = vmatpush1.bf16.msra.mxu0 0
    %107 = vmatprep.subr.bf16.mxu0 0
    %108 = vmatpush1.bf16.msra.mxu0 0
    %109 = vmatprep.subr.bf16.mxu0 0
    %110 = vmatpush1.bf16.msra.mxu0 0
    %111 = vmatprep.subr.bf16.mxu0 0
    %112 = vmatpush1.bf16.msra.mxu0 0
    %113 = vmatprep.subr.bf16.mxu0 0
    %114 = vmatpush1.bf16.msra.mxu0 %v97
    %115 = vmatprep.subr.bf16.mxu0 0
    %116 = vmatpush2.bf16.msra.mxu0 0
    %117 = vmatprep.subr.bf16.mxu0 0
    %118 = vmatpush2.bf16.msra.mxu0 0
    %119 = vmatprep.subr.bf16.mxu0 0
    %120 = vmatpush2.bf16.msra.mxu0 0
    %121 = vmatprep.subr.bf16.mxu0 0
    %122 = vmatpush2.bf16.msra.mxu0 0
    %123 = vmatprep.subr.bf16.mxu0 0
    %124 = vmatpush2.bf16.msra.mxu0 0
    %125 = vmatprep.subr.bf16.mxu0 0
    %126 = vmatpush2.bf16.msra.mxu0 0
    %127 = vmatprep.subr.bf16.mxu0 0
    %128 = vmatpush2.bf16.msra.mxu0 0
    %129 = vmatprep.subr.bf16.mxu0 0
    %130 = vmatpush2.bf16.msra.mxu0 0
    %131 = vmatprep.mubr.bf16.mxu0 0
    %132 = vmatmul.mubr.bf16.gmra.mxu0 %v90
    %v133 = vpop.f32.mrf.mxu0
    %v134 = vadd.f32 %v86, %v133
    %v135 = vpop.f32.mrf.mxu0
    %v136 = vpop.f32.mrf.mxu0
    %v137 = vpop.f32.mrf.mxu0
    %138 = vdwg.mxu0
    %v139 = vmax.f32 %v134, 0.0
    %v140 = vpack.c.bf16 %v139, %v139
    %v141 = vld [vmem:[#allocation7] sm:$0xf]
    %v142 = vld [vmem:[#allocation7 + $0x4] sm:$0xf]
    %v143 = vld [vmem:[#allocation7 + $0x8] sm:$0xf]
    %v144 = vld [vmem:[#allocation7 + $0xc] sm:$0xf]
    %v145 = vld [vmem:[#allocation7 + $0x10] sm:$0xf]
    %v146 = vld [vmem:[#allocation7 + $0x14] sm:$0xf]
    %v147 = vld [vmem:[#allocation7 + $0x18] sm:$0xf]
    %v148 = vld [vmem:[#allocation7 + $0x1c] sm:$0xf]
    %v149 = vld [vmem:[#allocation7 + $0x20] sm:$0xf]
    %v150 = vld [vmem:[#allocation7 + $0x24] sm:$0xf]
    %v151 = vld [vmem:[#allocation7 + $0x28] sm:$0xf]
    %v152 = vld [vmem:[#allocation7 + $0x2c] sm:$0xf]
    %v153 = vld [vmem:[#allocation7 + $0x30] sm:$0xf]
    %v154 = vld [vmem:[#allocation7 + $0x34] sm:$0xf]
    %v155 = vld [vmem:[#allocation7 + $0x38] sm:$0xf]
    %v156 = vld [vmem:[#allocation7 + $0x3c] sm:$0xf]
    %v157 = vld [vmem:[%s4] sm:$0x1]
    %v159 = vlaneseq
    %v160 = vshrl.u32 %v159, 7
    %v161 = vsub.s32 0, %v160
    %v162 = vrot.slane %v157, %v161
    %v180 = vunpack.c.l.b16 %v141
    %v181 = vunpack.c.l.b16 %v142
    %v182 = vunpack.c.l.b16 %v143
    %v183 = vunpack.c.l.b16 %v144
    %v184 = vunpack.c.l.b16 %v145
    %v185 = vunpack.c.l.b16 %v146
    %v186 = vunpack.c.l.b16 %v147
    %v187 = vunpack.c.l.b16 %v148
    %v188 = vunpack.c.l.b16 %v149
    %v189 = vunpack.c.l.b16 %v150
    %v190 = vunpack.c.l.b16 %v151
    %v191 = vunpack.c.l.b16 %v152
    %v192 = vunpack.c.l.b16 %v153
    %v193 = vunpack.c.l.b16 %v154
    %v194 = vunpack.c.l.b16 %v155
    %v195 = vunpack.c.l.b16 %v156
    %v196 = vpack.c.b16 %v181, %v180
    %v197 = vpack.c.b16 %v183, %v182
    %v198 = vpack.c.b16 %v185, %v184
    %v199 = vpack.c.b16 %v187, %v186
    %v200 = vpack.c.b16 %v189, %v188
    %v201 = vpack.c.b16 %v191, %v190
    %v202 = vpack.c.b16 %v193, %v192
    %v203 = vpack.c.b16 %v195, %v194
    %212 = vmatprep.subr.bf16.mxu0 0
    %213 = vmatpush1.bf16.msra.mxu0 %v203
    %214 = vmatprep.subr.bf16.mxu0 0
    %215 = vmatpush1.bf16.msra.mxu0 %v202
    %216 = vmatprep.subr.bf16.mxu0 0
    %217 = vmatpush1.bf16.msra.mxu0 %v201
    %218 = vmatprep.subr.bf16.mxu0 0
    %219 = vmatpush1.bf16.msra.mxu0 %v200
    %220 = vmatprep.subr.bf16.mxu0 0
    %221 = vmatpush1.bf16.msra.mxu0 %v199
    %222 = vmatprep.subr.bf16.mxu0 0
    %223 = vmatpush1.bf16.msra.mxu0 %v198
    %224 = vmatprep.subr.bf16.mxu0 0
    %225 = vmatpush1.bf16.msra.mxu0 %v197
    %226 = vmatprep.subr.bf16.mxu0 0
    %227 = vmatpush1.bf16.msra.mxu0 %v196
    %228 = vmatprep.subr.bf16.mxu0 0
    %229 = vmatpush2.bf16.msra.mxu0 0
    %230 = vmatprep.subr.bf16.mxu0 0
    %231 = vmatpush2.bf16.msra.mxu0 0
    %232 = vmatprep.subr.bf16.mxu0 0
    %233 = vmatpush2.bf16.msra.mxu0 0
    %234 = vmatprep.subr.bf16.mxu0 0
    %235 = vmatpush2.bf16.msra.mxu0 0
    %236 = vmatprep.subr.bf16.mxu0 0
    %237 = vmatpush2.bf16.msra.mxu0 0
    %238 = vmatprep.subr.bf16.mxu0 0
    %239 = vmatpush2.bf16.msra.mxu0 0
    %240 = vmatprep.subr.bf16.mxu0 0
    %241 = vmatpush2.bf16.msra.mxu0 0
    %242 = vmatprep.subr.bf16.mxu0 0
    %243 = vmatpush2.bf16.msra.mxu0 0
    %244 = vmatprep.mubr.bf16.mxu0 0
    %245 = vmatmul.mubr.bf16.gmra.mxu0 %v140
    %v246 = vpop.f32.mrf.mxu0
    %v247 = vadd.f32 %v162, %v246
    %v248 = vpop.f32.mrf.mxu0
    %v249 = vpop.f32.mrf.mxu0
    %v250 = vpop.f32.mrf.mxu0
    %251 = vdwg.mxu0
    %v252 = vmax.f32 %v247, 0.0
    %v253 = vpack.c.bf16 %v252, %v252
    %v254 = vld [vmem:[#allocation8] sm:$0xf]
    %v255 = vld [vmem:[#allocation8 + $0x4] sm:$0xf]
    %v256 = vld [vmem:[#allocation8 + $0x8] sm:$0xf]
    %v257 = vld [vmem:[#allocation8 + $0xc] sm:$0xf]
    %v258 = vld [vmem:[#allocation8 + $0x10] sm:$0xf]
    %v259 = vld [vmem:[#allocation8 + $0x14] sm:$0xf]
    %v260 = vld [vmem:[#allocation8 + $0x18] sm:$0xf]
    %v261 = vld [vmem:[#allocation8 + $0x1c] sm:$0xf]
    %v262 = vld [vmem:[#allocation8 + $0x20] sm:$0xf]
    %v263 = vld [vmem:[#allocation8 + $0x24] sm:$0xf]
    %v264 = vld [vmem:[#allocation8 + $0x28] sm:$0xf]
    %v265 = vld [vmem:[#allocation8 + $0x2c] sm:$0xf]
    %v266 = vld [vmem:[#allocation8 + $0x30] sm:$0xf]
    %v267 = vld [vmem:[#allocation8 + $0x34] sm:$0xf]
    %v268 = vld [vmem:[#allocation8 + $0x38] sm:$0xf]
    %v269 = vld [vmem:[#allocation8 + $0x3c] sm:$0xf]
    %v270 = vld [vmem:[%s6] sm:$0x1]
    %v272 = vlaneseq
    %v273 = vshrl.u32 %v272, 7
    %v274 = vsub.s32 0, %v273
    %v275 = vrot.slane %v270, %v274
    %v293 = vunpack.c.l.b16 %v254
    %v294 = vunpack.c.l.b16 %v255
    %v295 = vunpack.c.l.b16 %v256
    %v296 = vunpack.c.l.b16 %v257
    %v297 = vunpack.c.l.b16 %v258
    %v298 = vunpack.c.l.b16 %v259
    %v299 = vunpack.c.l.b16 %v260
    %v300 = vunpack.c.l.b16 %v261
    %v301 = vunpack.c.l.b16 %v262
    %v302 = vunpack.c.l.b16 %v263
    %v303 = vunpack.c.l.b16 %v264
    %v304 = vunpack.c.l.b16 %v265
    %v305 = vunpack.c.l.b16 %v266
    %v306 = vunpack.c.l.b16 %v267
    %v307 = vunpack.c.l.b16 %v268
    %v308 = vunpack.c.l.b16 %v269
    %v309 = vpack.c.b16 %v294, %v293
    %v310 = vpack.c.b16 %v296, %v295
    %v311 = vpack.c.b16 %v298, %v297
    %v312 = vpack.c.b16 %v300, %v299
    %v313 = vpack.c.b16 %v302, %v301
    %v314 = vpack.c.b16 %v304, %v303
    %v315 = vpack.c.b16 %v306, %v305
    %v316 = vpack.c.b16 %v308, %v307
    %325 = vmatprep.subr.bf16.mxu0 0
    %326 = vmatpush1.bf16.msra.mxu0 %v316
    %327 = vmatprep.subr.bf16.mxu0 0
    %328 = vmatpush1.bf16.msra.mxu0 %v315
    %329 = vmatprep.subr.bf16.mxu0 0
    %330 = vmatpush1.bf16.msra.mxu0 %v314
    %331 = vmatprep.subr.bf16.mxu0 0
    %332 = vmatpush1.bf16.msra.mxu0 %v313
    %333 = vmatprep.subr.bf16.mxu0 0
    %334 = vmatpush1.bf16.msra.mxu0 %v312
    %335 = vmatprep.subr.bf16.mxu0 0
    %336 = vmatpush1.bf16.msra.mxu0 %v311
    %337 = vmatprep.subr.bf16.mxu0 0
    %338 = vmatpush1.bf16.msra.mxu0 %v310
    %339 = vmatprep.subr.bf16.mxu0 0
    %340 = vmatpush1.bf16.msra.mxu0 %v309
    %341 = vmatprep.subr.bf16.mxu0 0
    %342 = vmatpush2.bf16.msra.mxu0 0
    %343 = vmatprep.subr.bf16.mxu0 0
    %344 = vmatpush2.bf16.msra.mxu0 0
    %345 = vmatprep.subr.bf16.mxu0 0
    %346 = vmatpush2.bf16.msra.mxu0 0
    %347 = vmatprep.subr.bf16.mxu0 0
    %348 = vmatpush2.bf16.msra.mxu0 0
    %349 = vmatprep.subr.bf16.mxu0 0
    %350 = vmatpush2.bf16.msra.mxu0 0
    %351 = vmatprep.subr.bf16.mxu0 0
    %352 = vmatpush2.bf16.msra.mxu0 0
    %353 = vmatprep.subr.bf16.mxu0 0
    %354 = vmatpush2.bf16.msra.mxu0 0
    %355 = vmatprep.subr.bf16.mxu0 0
    %356 = vmatpush2.bf16.msra.mxu0 0
    %357 = vmatprep.mubr.bf16.mxu0 0
    %358 = vmatmul.mubr.bf16.gmra.mxu0 %v253
    %v359 = vpop.f32.mrf.mxu0
    %v360 = vadd.f32 %v275, %v359
    %v361 = vpop.f32.mrf.mxu0
    %v362 = vpop.f32.mrf.mxu0
    %v363 = vpop.f32.mrf.mxu0
    %364 = vdwg.mxu0
    %365 = vst [vmem:[#allocation10] sm:$0xff] %v360
    // Predicated region
    $region46: #{tpu_custom_call.1} parent=1 // pred_check
      _
    $region47: #{tpu_custom_call.1} parent=1 // pred_check_branch
      %367 = sbr.rel (0) target = $region49
    $region48: #{tpu_custom_call.1} parent=1 // pred_region
      %s369 = ssub.s32 128, 128
      %370 = vsyncadd [#allocation4], %s369
      %s372 = sshll.u32 [#allocation10], 4
      %s373 = int_to_ptr.vmem [resolvable:$true] %s372
      %375 = dma.vmem_to_hbm [thread:$0]  %s373, 128, %s7, [#allocation4]
    $region49: #{tpu_custom_call.1} parent=1 // pred_fallthru
      _
    // Predicated region
    $region50: #{tpu_custom_call.1} parent=1 // pred_check
      _
    $region51: #{tpu_custom_call.1} parent=1 // pred_check_branch
      %377 = sbr.rel (0) target = $region53
    $region52: #{tpu_custom_call.1} parent=1 // pred_region
      %378 = dma.done [#allocation4], 128
    $region53: #{tpu_custom_call.1} parent=1 // pred_fallthru
      _
    %379 = vsyncpa [#allocation3], 1
    %380 = vsyncpa [#allocation6], 1
    %381 = vsyncpa [#allocation9], 1
    %382 = vsyncpa [#allocation4], 1

</llo_original>
